<compile_context>
chip_gen: v7x
topology: tpu7x:2x2x1
jax: 0.10.0
libtpu: 0.0.40
codegen_flags: <defaults>
</compile_context>

<pallas_src>
import math
import functools

import jax
import jax.numpy as jnp
from jax import lax
from jax.experimental import pallas as pl
from jax.experimental.pallas import tpu as pltpu


def _round_up(x: int, m: int) -> int:
    return (x + m - 1) // m * m


def _embed_gather_kernel(ids_ref, table_ref, out_ref, *, scale, tile_tok):
    """One grid step gathers + scales `tile_tok` embedding rows.

    ids_ref:   (n_pad,) int32 token ids, scalar-prefetched into SMEM.
    table_ref: (vocab, d_model) embedding table, VMEM-resident (constant block index).
    out_ref:   (tile_tok, d_model) lane/sublane-dense output tile.
    """
    base = pl.program_id(0) * tile_tok

    def body(t, carry):
        tok = ids_ref[base + t]                       # scalar read from SMEM
        out_ref[pl.ds(t, 1), :] = table_ref[pl.ds(tok, 1), :] * scale
        return carry

    lax.fori_loop(0, tile_tok, body, 0)


def input_embeddings(x, emb_table, *, tile_tok=256):
    """x: (batch, seq) int32 token ids; emb_table: (vocab, d_model) float.

    Returns (batch, seq, d_model) = emb_table[x] * sqrt(d_model).
    """
    batch, seq = x.shape
    vocab, d_model = emb_table.shape
    n_tok = batch * seq
    scale = math.sqrt(d_model)

    # Tokens per grid step: sublane-dense (multiple of 8), capped at the problem size.
    tile_tok = min(tile_tok, _round_up(n_tok, 8))
    n_pad = _round_up(n_tok, tile_tok)

    ids = x.reshape(n_tok).astype(jnp.int32)
    if n_pad != n_tok:
        # Padded slots gather row 0; their output rows are sliced off below.
        ids = jnp.pad(ids, (0, n_pad - n_tok))

    # VMEM budget: resident table + double-buffered output tiles + slack.
    itemsize = jnp.dtype(emb_table.dtype).itemsize
    table_bytes = vocab * d_model * itemsize
    out_tile_bytes = tile_tok * d_model * itemsize
    vmem_limit = int(max(32 << 20,
                         min(100 << 20, table_bytes + 2 * out_tile_bytes + (4 << 20))))
    # TODO(synk): if the table alone exceeds the VMEM budget (e.g. 32K x 4K f32 on
    # v7x's 64 MiB VMEM), tile d_model into column slabs as a second grid axis or
    # store the table in bf16 rather than keeping the full f32 table resident.

    out_flat = pl.pallas_call(
        functools.partial(_embed_gather_kernel, scale=scale, tile_tok=tile_tok),
        out_shape=jax.ShapeDtypeStruct((n_pad, d_model), emb_table.dtype),
        grid_spec=pltpu.PrefetchScalarGridSpec(
            num_scalar_prefetch=1,            # token ids land in SMEM
            grid=(n_pad // tile_tok,),        # TILE_TOK tokens per grid step
            in_specs=[
                # Whole embedding table, constant block index -> fetched once,
                # stays VMEM-resident across all grid steps.
                pl.BlockSpec((vocab, d_model), lambda i, ids_pref: (0, 0)),
            ],
            # Lane/sublane-dense output tile; one big contiguous writeback per step.
            out_specs=pl.BlockSpec((tile_tok, d_model), lambda i, ids_pref: (i, 0)),
        ),
        compiler_params=pltpu.CompilerParams(
            # Each grid step writes a disjoint output tile -> safe to shard across
            # v7x's two TensorCores; neutral on single-TC v5e/v6e.
            dimension_semantics=("parallel",),
            vmem_limit_bytes=vmem_limit,
        ),
    )(ids, emb_table)

    return out_flat[:n_tok].reshape(batch, seq, d_model)


if __name__ == "__main__":
    # Small but lane-dense shapes: d_model multiple of 128, token tile multiple of 8.
    d_model = 128
    vocab_size = 512
    batch, seq = 2, 8

    key = jax.random.PRNGKey(0)
    k_emb, k_ids = jax.random.split(key)

    # Deterministic synthetic parameters (nn.Embedding weight ~ N(0, 1)).
    emb_table = jax.random.normal(k_emb, (vocab_size, d_model), dtype=jnp.float32)
    x = jax.random.randint(k_ids, (batch, seq), 0, vocab_size, dtype=jnp.int32)

    out = input_embeddings(x, emb_table)
    out = jax.block_until_ready(out)

    # Reference check (plain JAX gather * sqrt(d_model)).
    ref = jnp.take(emb_table, x, axis=0) * math.sqrt(d_model)
    assert out.shape == (batch, seq, d_model)
    assert jnp.allclose(out, ref, atol=1e-5, rtol=1e-5), float(jnp.max(jnp.abs(out - ref)))

    print("KERNEL_OK")
</pallas_src>

<mosaic_0001>
module attributes {stable_mosaic.version = 11 : i64} {
  func.func @_embed_gather_kernel(%arg0: i32, %arg1: memref<16xi32, #tpu.memory_space<smem>>, %arg2: memref<512x128xf32, #tpu.memory_space<vmem>>, %arg3: memref<16x128xf32, #tpu.memory_space<vmem>>) attributes {dimension_semantics = [#tpu.dimension_semantics<parallel>], iteration_bounds = array<i64: 1>, scalar_prefetch = 1 : i64, scratch_operands = 0 : i64, tpu.core_type = #tpu.core_type<tc>, window_params = [{pipeline_mode = #tpu.pipeline_mode<synchronous>, transform_indices = @transform_0, window_bounds = array<i64: 512, 128>}, {transform_indices = @transform_1, window_bounds = array<i64: 16, 128>}]} {
    %c16_i32 = arith.constant 16 : i32
    %0 = arith.muli %arg0, %c16_i32 : i32
    %c0_i32 = arith.constant 0 : i32
    %c16_i32_0 = arith.constant 16 : i32
    %1 = arith.addi %c0_i32, %c16_i32_0 : i32
    %c1_i32 = arith.constant 1 : i32
    scf.for %arg4 = %c0_i32 to %1 step %c1_i32  : i32 {
      %2 = arith.addi %0, %arg4 : i32
      %3 = arith.index_cast %2 : i32 to index
      %4 = memref.load %arg1[%3] : memref<16xi32, #tpu.memory_space<smem>>
      %5 = arith.index_cast %4 : i32 to index
      %c0 = arith.constant 0 : index
      %6 = vector.load %arg2[%5, %c0] : memref<512x128xf32, #tpu.memory_space<vmem>>, vector<1x128xf32>
      %cst = arith.constant 11.3137083 : f32
      %7 = vector.broadcast %cst : f32 to vector<1x128xf32>
      %8 = arith.mulf %6, %7 : vector<1x128xf32>
      %9 = arith.index_cast %arg4 : i32 to index
      %c0_2 = arith.constant 0 : index
      %10 = vector.load %arg3[%9, %c0_2] : memref<16x128xf32, #tpu.memory_space<vmem>>, vector<1x128xf32>
      tpu.vector_store %arg3[%9, %c0_2], %8 {strides = array<i32>} : memref<16x128xf32, #tpu.memory_space<vmem>>, vector<1x128xf32>,
    }
    %c16_i32_1 = arith.constant 16 : i32
    return
  }
  func.func @transform_0(%arg0: i32, %arg1: memref<16xi32, #tpu.memory_space<smem>>) -> (i32, i32) {
    %c0_i32 = arith.constant 0 : i32
    %c0_i32_0 = arith.constant 0 : i32
    %c0_i32_1 = arith.constant 0 : i32
    return %c0_i32, %c0_i32_0 : i32, i32
  }
  func.func @transform_1(%arg0: i32, %arg1: memref<16xi32, #tpu.memory_space<smem>>) -> (i32, i32) {
    %c0_i32 = arith.constant 0 : i32
    %c0_i32_0 = arith.constant 0 : i32
    return %arg0, %c0_i32 : i32, i32
  }
}

</mosaic_0001>

<llo_original>
// kernel: tpu_custom_call.1
$region0: #{tpu_custom_call.1}
  #allocation0 [shape = 'u32[]', space=smem, size = 0x4, offset = 0x4, fixed_abs, tag = 'smem constant byte address 0x4 - core index']
  #allocation1 [shape = 'u32[144,128]{1,0:T(1,128)}', space=vmem, size = 0x12000, scoped, tag = 'internal scratch']
  #allocation2 [shape = 's32[1]{0}', space=sflag, size = 0x4, scoped, tag = 'scoped memory for tpu_custom_call.1']
  #allocation3 [shape = 'u8[512]{0}', space=smem, size = 0x200, scoped, tag = 'prefetched SMEM operand 0']
  %s0 = inlined_call_operand.hbm [shape: s32[16], index: 0, kind: input, shape index: {}]
  %s1 = inlined_call_operand.hbm [shape: f32[512,128], index: 1, kind: input, shape index: {}]
  %s2 = inlined_call_operand.hbm [shape: f32[16,128], index: 2, kind: output, shape index: {}]
  %s3 = sld [smem:[#allocation0]]
  $region25: #{tpu_custom_call.1} parent=0
    _
  %s5 = ssub.s32 1, %s3
  %s6 = scalar_select 0, %s5, %s3
  %8 = dma.hbm_to_smem %s0, 16, [#allocation3], [#allocation2]
  %9 = dma.done [#allocation2], 16
  %10 = sfence
  $region1: #{tpu_custom_call.1} parent=0
    #allocation4 [shape = 'u8[262144]{0}', space=vmem, size = 0x40000, scoped, tag = 'input window, operand 1, single buffered']
    #allocation5 [shape = 's32[1]{0}', space=sflag, size = 0x4, scoped, tag = 'scoped memory for tpu_custom_call.1']
    #allocation6 [shape = 's32[1]{0}', space=sflag, size = 0x4, scoped, tag = 'scoped memory for tpu_custom_call.1']
    #allocation7 [shape = 'u8[8192]{0}', space=vmem, size = 0x2000, scoped, tag = 'output window, operand 0, single buffered']
    %11 = vsyncpa [#allocation5], 0
    %12 = vsyncpa [#allocation6], 0
    // Predicated region
    $region2: #{tpu_custom_call.1} parent=1 // pred_check
      _
    $region3: #{tpu_custom_call.1} parent=1 // pred_check_branch
      %14 = sbr.rel (0) target = $region5
    $region4: #{tpu_custom_call.1} parent=1 // pred_region
      %s16 = ssub.s32 8192, 8192
      %17 = vsyncadd [#allocation5], %s16
      %s18 = sshll.u32 [#allocation4], 4
      %s19 = int_to_ptr.vmem [resolvable:$true] %s18
      %24 = dma.hbm_to_vmem [thread:$0]  %s1, 8192, %s19, [#allocation5], 128, 128, 8
    $region5: #{tpu_custom_call.1} parent=1 // pred_fallthru
      _
    // Predicated region
    $region6: #{tpu_custom_call.1} parent=1 // pred_check
      _
    $region7: #{tpu_custom_call.1} parent=1 // pred_check_branch
      %26 = sbr.rel (0) target = $region9
    $region8: #{tpu_custom_call.1} parent=1 // pred_region
      %27 = dma.done [#allocation5], 8192
    $region9: #{tpu_custom_call.1} parent=1 // pred_fallthru
      _
    %s28 = smul.u32 0, 16
    loop: start=0, step=1, limit=16
    $region10: #{tpu_custom_call.1} parent=1 // loop_pre_header
      _
    $region11: #{tpu_custom_call.1} parent=1 // loop_header
      %s30 = sphi 0, %s34
      %p31 = scmp.ge.s32.totalorder %s30, 16
    $region12: #{tpu_custom_call.1} parent=1 // loop_header_branch
      %33 = sbr.rel (%p31) target = $region16
    $region13: #{tpu_custom_call.1} parent=1 // loop_body
      %s35 = sadd.s32 %s28, %s30
      %s36 = sld [smem:[#allocation3 + %s35]]
      %s37 = scalar_lea.vmem [#allocation4], %s36
      %v38 = vld [vmem:[%s37] sm:$0x1]
      %v39 = vmul.f32 %v38, 11.313708
      %s40 = scalar_lea.vmem [#allocation7], %s30
      %41 = vst [vmem:[%s40] sm:$0x1] %v39
    $region14: #{tpu_custom_call.1} parent=1 // loop_footer
      %s34 = sadd.s32 1, %s30
    $region15: #{tpu_custom_call.1} parent=1 // loop_footer_branch
      %29 = sbr.rel target = $region11
    $region16: #{tpu_custom_call.1} parent=1 // loop_exit
      _
    // Predicated region
    $region17: #{tpu_custom_call.1} parent=1 // pred_check
      _
    $region18: #{tpu_custom_call.1} parent=1 // pred_check_branch
      %43 = sbr.rel (0) target = $region20
    $region19: #{tpu_custom_call.1} parent=1 // pred_region
      %s45 = ssub.s32 256, 256
      %46 = vsyncadd [#allocation6], %s45
      %s47 = sshll.u32 [#allocation7], 4
      %s48 = int_to_ptr.vmem [resolvable:$true] %s47
      %53 = dma.vmem_to_hbm [thread:$0]  %s48, 256, %s2, [#allocation6], 128, 128, 8
    $region20: #{tpu_custom_call.1} parent=1 // pred_fallthru
      _
    // Predicated region
    $region21: #{tpu_custom_call.1} parent=1 // pred_check
      _
    $region22: #{tpu_custom_call.1} parent=1 // pred_check_branch
      %55 = sbr.rel (0) target = $region24
    $region23: #{tpu_custom_call.1} parent=1 // pred_region
      %56 = dma.done [#allocation6], 256
    $region24: #{tpu_custom_call.1} parent=1 // pred_fallthru
      _
    %57 = vsyncpa [#allocation5], 1
    %58 = vsyncpa [#allocation6], 1

</llo_original>
